<compile_context>
chip_gen: v7x
topology: tpu7x:2x2x1
jax: 0.10.0
libtpu: 0.0.40
codegen_flags: <defaults>
</compile_context>

<pallas_src>
import functools

import jax
import jax.numpy as jnp
from jax import lax
from jax.experimental import pallas as pl
from jax.experimental.pallas import tpu as pltpu


def _round_up(x, m):
    return (x + m - 1) // m * m


def _vmem_capacity_bytes():
    """Physical VMEM per core; conservative 64 MiB (v7x) fallback."""
    try:
        cap = int(getattr(pltpu.get_tpu_info(), "vmem_capacity_bytes", 0))
        if cap > 0:
            return cap
    except Exception:
        pass
    return 64 * 1024 * 1024


# ----------------------------------------------------------------------------
# Pallas kernel: streamed normalized correlation + online max/argmax over refs
# ----------------------------------------------------------------------------
def _corr_argmax_kernel(lrT_ref, rf_ref, ids_ref, star_ref, arg_ref,
                        *, tn, rf_resident, sentinel):
    # lrT_ref  : (1, D_pad, TM) bf16  normalized lr patch vectors, transposed
    # rf_ref   : (1, N_ref_pad, D_pad) bf16 (resident) or (1, TN, D_pad) (streamed)
    # ids_ref  : (1, TN, 1) f32  global reference-row index column
    # star_ref : (1, 1, TM) f32  output / running max     (resident across j)
    # arg_ref  : (1, 1, TM) i32  output / running argmax  (resident across j)
    j = pl.program_id(2)

    @pl.when(j == 0)
    def _():
        star_ref[...] = jnp.full(star_ref.shape, -jnp.inf, star_ref.dtype)
        arg_ref[...] = jnp.zeros(arg_ref.shape, arg_ref.dtype)

    if rf_resident:
        off = pl.multiple_of(j * tn, tn)
        rf = rf_ref[0, pl.ds(off, tn), :]            # (TN, D_pad) slice of resident slab
    else:
        rf = rf_ref[0]                               # (TN, D_pad) streamed tile

    # MXU, natural (TN, D) @ (D, TM) orientation (no in-kernel transpose).
    # Padded-ref masking is carried by the augmented -1e30 feature column, so the
    # matmul result is already "biased" for padded reference rows.
    s = lax.dot_general(rf, lrT_ref[0],
                        dimension_numbers=(((1,), (0,)), ((), ())),
                        preferred_element_type=jnp.float32)          # (TN, TM) f32

    # Per-tile max / first-argmax over the reference (sublane) axis.
    tile_max = jnp.max(s, axis=0, keepdims=True)                     # (1, TM)
    ids = ids_ref[0]                                                 # (TN, 1) global ids
    tile_arg = jnp.min(jnp.where(s >= tile_max, ids, jnp.float32(sentinel)),
                       axis=0, keepdims=True).astype(jnp.int32)      # (1, TM)

    # Online update directly in the resident output blocks (first max wins ties).
    prev_m = star_ref[0]
    better = tile_max > prev_m
    star_ref[0] = jnp.where(better, tile_max, prev_m)
    arg_ref[0] = jnp.where(better, tile_arg, arg_ref[0])


def correlation_argmax(lr_t, rf_t, *, tm=512, tn=256):
    """lr_t: (B, N_lr, D) f32, rf_t: (B, N_ref, D) f32
       -> star (B, N_lr) f32, arg (B, N_lr) i32 : max / argmax over reference
          positions of the normalized correlation (== torch.max(bmm, dim=1))."""
    B, N_lr, D = lr_t.shape
    N_ref = rf_t.shape[1]
    eps = jnp.float32(1e-12)

    # F.normalize in f32 (x / max(||x||, eps)), then bf16 for the MXU.
    lr_n = lr_t * lax.rsqrt(jnp.maximum(jnp.sum(lr_t * lr_t, -1, keepdims=True), eps * eps))
    rf_n = rf_t * lax.rsqrt(jnp.maximum(jnp.sum(rf_t * rf_t, -1, keepdims=True), eps * eps))

    # Tile / pad sizes: lane-aligned D, (8,128)-clean tiles, TM = MXU lane dim.
    TN = min(tn, _round_up(N_ref, 128))
    TM = min(tm, _round_up(N_lr, 128))
    N_ref_pad = _round_up(N_ref, TN)
    N_lr_pad = _round_up(N_lr, TM)
    has_ref_pad = N_ref_pad != N_ref
    # Reserve one padded feature column for the ref-row mask when needed.
    D_pad = _round_up(D + (1 if has_ref_pad else 0), 128)

    lr_p = jnp.pad(lr_n, ((0, 0), (0, N_lr_pad - N_lr), (0, D_pad - D)))
    rf_p = jnp.pad(rf_n, ((0, 0), (0, N_ref_pad - N_ref), (0, D_pad - D)))
    if has_ref_pad:
        # Free masking on the MXU: <padded rf row, any lr row> = -1e30 << real scores.
        lr_p = lr_p.at[:, :, D_pad - 1].set(1.0)
        rf_p = rf_p.at[:, N_ref:, D_pad - 1].set(-1e30)

    # lr pre-transposed once so the kernel matmul is (TN, D) @ (D, TM).
    lrT = jnp.transpose(lr_p.astype(jnp.bfloat16), (0, 2, 1))        # (B, D_pad, N_lr_pad)
    rf_p = rf_p.astype(jnp.bfloat16)                                 # (B, N_ref_pad, D_pad)

    # Global reference-row index column (f32 is exact for realistic N_ref).
    ids = jnp.arange(N_ref_pad, dtype=jnp.float32).reshape(1, N_ref_pad, 1)

    # ---- Generation-aware VMEM budgeting: keep rf resident per batch if it fits.
    cap = _vmem_capacity_bytes()                  # 128 MiB v5e/v6e, 64 MiB v7x
    budget = int(cap * 0.85)
    bytes_lr = 2 * D_pad * TM * 2                 # double-buffered bf16 lr tile
    bytes_misc = 2 * TN * TM * 4 + (4 << 20)      # score tile + compiler slack
    bytes_rf_resident = 2 * N_ref_pad * D_pad * 2 # double-buffered bf16 slab
    # TODO(synk): pipeline_mode=pl.Buffered(1) on the resident rf spec would halve
    # its footprint (it is revisited, never re-streamed); default buffering kept.
    rf_resident = bytes_rf_resident + bytes_lr + bytes_misc + (8 << 20) <= budget
    if rf_resident:
        rf_spec = pl.BlockSpec((1, N_ref_pad, D_pad), lambda b, i, j: (b, 0, 0))
        need = bytes_rf_resident + bytes_lr + bytes_misc
    else:
        rf_spec = pl.BlockSpec((1, TN, D_pad), lambda b, i, j: (b, j, 0))
        need = 2 * TN * D_pad * 2 + bytes_lr + bytes_misc
    vmem_limit = int(max(32 << 20, min(budget, need + (8 << 20))))

    kernel = functools.partial(_corr_argmax_kernel, tn=TN,
                               rf_resident=rf_resident,
                               sentinel=float(N_ref_pad))

    star, arg = pl.pallas_call(
        kernel,
        out_shape=(
            jax.ShapeDtypeStruct((B, 1, N_lr_pad), jnp.float32),
            jax.ShapeDtypeStruct((B, 1, N_lr_pad), jnp.int32),
        ),
        grid_spec=pltpu.PrefetchScalarGridSpec(
            num_scalar_prefetch=0,
            grid=(B, N_lr_pad // TM, N_ref_pad // TN),
            in_specs=[
                # lr tile: constant across j -> fetched once per (b, i).
                pl.BlockSpec((1, D_pad, TM), lambda b, i, j: (b, 0, i)),
                # rf: VMEM-resident per batch (fetched once per b) or streamed per j.
                rf_spec,
                # tiny global ref-row index column, streamed per j.
                pl.BlockSpec((1, TN, 1), lambda b, i, j: (0, j, 0)),
            ],
            out_specs=[
                pl.BlockSpec((1, 1, TM), lambda b, i, j: (b, 0, i)),
                pl.BlockSpec((1, 1, TM), lambda b, i, j: (b, 0, i)),
            ],
        ),
        compiler_params=pltpu.CompilerParams(
            dimension_semantics=("parallel", "parallel", "arbitrary"),
            vmem_limit_bytes=vmem_limit,
        ),
    )(lrT, rf_p, ids)

    return star[:, 0, :N_lr], arg[:, 0, :N_lr]


# ----------------------------------------------------------------------------
# JAX glue: unfold / fold / gather (pure data movement, same semantics as torch)
# ----------------------------------------------------------------------------
def unfold(x, k, pad, stride):
    """F.unfold: (B, C, H, W) -> (B, C*k*k, L), PyTorch (C, kh, kw) channel order."""
    B, C, H, W = x.shape
    xp = jnp.pad(x, ((0, 0), (0, 0), (pad, pad), (pad, pad)))
    Ho = (H + 2 * pad - k) // stride + 1
    Wo = (W + 2 * pad - k) // stride + 1
    cols = []
    for i in range(k):
        for j in range(k):
            cols.append(xp[:, :, i:i + stride * Ho:stride, j:j + stride * Wo:stride])
    cols = jnp.stack(cols, axis=2)                     # (B, C, k*k, Ho, Wo)
    return cols.reshape(B, C * k * k, Ho * Wo)


def fold(cols, output_size, k, pad, stride):
    """F.fold: inverse of unfold (overlap-add)."""
    B, CKK, L = cols.shape
    C = CKK // (k * k)
    Hout, Wout = output_size
    Ho = (Hout + 2 * pad - k) // stride + 1
    Wo = (Wout + 2 * pad - k) // stride + 1
    cols = cols.reshape(B, C, k, k, Ho, Wo)
    out = jnp.zeros((B, C, Hout + 2 * pad, Wout + 2 * pad), cols.dtype)
    for i in range(k):
        for j in range(k):
            out = out.at[:, :, i:i + stride * Ho:stride, j:j + stride * Wo:stride].add(
                cols[:, :, i, j])
    return out[:, :, pad:pad + Hout, pad:pad + Wout]


def bis(inp, idx):
    """torch.gather along dim=2 with one index per (batch, position)."""
    # TODO(synk): fuse into a Pallas scalar-prefetch DMA gather straight from the
    # ref pyramids to avoid materializing the three fully-unfolded ref tensors.
    return jnp.take_along_axis(inp, idx[:, None, :].astype(jnp.int32), axis=2)


# ----------------------------------------------------------------------------
# Forward (train=True path of TextureTransfer)
# ----------------------------------------------------------------------------
@jax.jit
def texture_transfer(lrsr_lv3, refsr_lv3, ref_lv1, ref_lv2, ref_lv3):
    B, _, H, W = lrsr_lv3.shape

    lrsr_unf = unfold(lrsr_lv3, 3, 1, 1)               # (B, C*9, H*W)
    refsr_unf = unfold(refsr_lv3, 3, 1, 1)             # (B, C*9, H*W)

    lr_t = jnp.transpose(lrsr_unf, (0, 2, 1)).astype(jnp.float32)    # (B, HW, D)
    rf_t = jnp.transpose(refsr_unf, (0, 2, 1)).astype(jnp.float32)   # (B, HW, D)

    # Hot path: Pallas kernel (normalized correlation + online max/argmax).
    R_star, R_star_arg = correlation_argmax(lr_t, rf_t)              # (B, HW) each

    ref3_unf = unfold(ref_lv3, 3, 1, 1)
    ref2_unf = unfold(ref_lv2, 6, 2, 2)
    ref1_unf = unfold(ref_lv1, 12, 4, 4)

    T3u = bis(ref3_unf, R_star_arg)
    T2u = bis(ref2_unf, R_star_arg)
    T1u = bis(ref1_unf, R_star_arg)

    T_lv3 = fold(T3u, (H, W), 3, 1, 1) / 9.0
    T_lv2 = fold(T2u, (2 * H, 2 * W), 6, 2, 2) / 9.0
    T_lv1 = fold(T1u, (4 * H, 4 * W), 12, 4, 4) / 9.0

    S = R_star.reshape(B, 1, H, W)
    return S, T_lv3, T_lv2, T_lv1


# ----------------------------------------------------------------------------
if __name__ == "__main__":
    key = jax.random.PRNGKey(0)
    B, C, H, W = 2, 4, 8, 8
    k1, k2, k3, k4, k5 = jax.random.split(key, 5)

    lrsr_lv3 = jax.random.normal(k1, (B, C, H, W), jnp.float32)
    refsr_lv3 = jax.random.normal(k2, (B, C, H, W), jnp.float32)
    ref_lv3 = jax.random.normal(k3, (B, C, H, W), jnp.float32)
    ref_lv2 = jax.random.normal(k4, (B, C, 2 * H, 2 * W), jnp.float32)
    ref_lv1 = jax.random.normal(k5, (B, C, 4 * H, 4 * W), jnp.float32)

    S, T_lv3, T_lv2, T_lv1 = texture_transfer(
        lrsr_lv3, refsr_lv3, ref_lv1, ref_lv2, ref_lv3)
    jax.block_until_ready((S, T_lv3, T_lv2, T_lv1))

    assert S.shape == (B, 1, H, W)
    assert T_lv3.shape == (B, C, H, W)
    assert T_lv2.shape == (B, C, 2 * H, 2 * W)
    assert T_lv1.shape == (B, C, 4 * H, 4 * W)

    # Pure-JAX f32 reference for the Pallas hot path (generous tol: MXU runs bf16).
    lr_u = jnp.transpose(unfold(lrsr_lv3, 3, 1, 1), (0, 2, 1))
    rf_u = jnp.transpose(unfold(refsr_lv3, 3, 1, 1), (0, 2, 1))
    lr_nn = lr_u / jnp.maximum(jnp.linalg.norm(lr_u, axis=-1, keepdims=True), 1e-12)
    rf_nn = rf_u / jnp.maximum(jnp.linalg.norm(rf_u, axis=-1, keepdims=True), 1e-12)
    R = jnp.einsum('brd,bqd->brq', rf_nn, lr_nn)
    star_ref = jnp.max(R, axis=1).reshape(S.shape)
    assert bool(jnp.allclose(S, star_ref, atol=5e-2)), "correlation max mismatch"

    print("KERNEL_OK")
</pallas_src>

<mosaic_0001>
module attributes {stable_mosaic.version = 11 : i64} {
  func.func @_corr_argmax_kernel(%arg0: i32, %arg1: i32, %arg2: i32, %arg3: memref<1x128x128xbf16, #tpu.memory_space<vmem>>, %arg4: memref<1x128x128xbf16, #tpu.memory_space<vmem>>, %arg5: memref<1x128x1xf32, #tpu.memory_space<vmem>>, %arg6: memref<1x1x128xf32, #tpu.memory_space<vmem>>, %arg7: memref<1x1x128xi32, #tpu.memory_space<vmem>>) attributes {dimension_semantics = [#tpu.dimension_semantics<parallel>, #tpu.dimension_semantics<parallel>, #tpu.dimension_semantics<arbitrary>], iteration_bounds = array<i64: 2, 1, 1>, scalar_prefetch = 0 : i64, scratch_operands = 0 : i64, tpu.core_type = #tpu.core_type<tc>, window_params = [{transform_indices = @transform_0, window_bounds = array<i64: 1, 128, 128>}, {transform_indices = @transform_1, window_bounds = array<i64: 1, 128, 128>}, {transform_indices = @transform_2, window_bounds = array<i64: 1, 128, 1>}, {transform_indices = @transform_3, window_bounds = array<i64: 1, 1, 128>}, {transform_indices = @transform_4, window_bounds = array<i64: 1, 1, 128>}]} {
    %c0_i32 = arith.constant 0 : i32
    %0 = arith.cmpi eq, %arg2, %c0_i32 : i32
    %1 = arith.extui %0 : i1 to i32
    %c0_i32_0 = arith.constant 0 : i32
    %2 = arith.cmpi ne, %1, %c0_i32_0 : i32
    scf.if %2 {
      %cst_23 = arith.constant 0xFF800000 : f32
      %37 = vector.broadcast %cst_23 : f32 to vector<1x1x128xf32>
      %c0_24 = arith.constant 0 : index
      %c0_25 = arith.constant 0 : index
      %c0_26 = arith.constant 0 : index
      %38 = vector.load %arg6[%c0_24, %c0_25, %c0_26] : memref<1x1x128xf32, #tpu.memory_space<vmem>>, vector<1x1x128xf32>
      tpu.vector_store %arg6[%c0_24, %c0_25, %c0_26], %37 {strides = array<i32>} : memref<1x1x128xf32, #tpu.memory_space<vmem>>, vector<1x1x128xf32>,
      %c0_i32_27 = arith.constant 0 : i32
      %39 = vector.broadcast %c0_i32_27 : i32 to vector<1x1x128xi32>
      %c0_28 = arith.constant 0 : index
      %c0_29 = arith.constant 0 : index
      %c0_30 = arith.constant 0 : index
      %40 = vector.load %arg7[%c0_28, %c0_29, %c0_30] : memref<1x1x128xi32, #tpu.memory_space<vmem>>, vector<1x1x128xi32>
      tpu.vector_store %arg7[%c0_28, %c0_29, %c0_30], %39 {strides = array<i32>} : memref<1x1x128xi32, #tpu.memory_space<vmem>>, vector<1x1x128xi32>,
    } else {
    }
    %c128_i32 = arith.constant 128 : i32
    %3 = arith.muli %arg2, %c128_i32 : i32
    %4 = tpu.assume_multiple %3, 128 : i32
    %c0 = arith.constant 0 : index
    %5 = arith.index_cast %4 : i32 to index
    %c0_1 = arith.constant 0 : index
    %6 = vector.load %arg4[%c0, %5, %c0_1] : memref<1x128x128xbf16, #tpu.memory_space<vmem>>, vector<1x128x128xbf16>
    %7 = vector.shape_cast %6 : vector<1x128x128xbf16> to vector<128x128xbf16>
    %c0_2 = arith.constant 0 : index
    %c0_3 = arith.constant 0 : index
    %c0_4 = arith.constant 0 : index
    %8 = vector.load %arg3[%c0_2, %c0_3, %c0_4] : memref<1x128x128xbf16, #tpu.memory_space<vmem>>, vector<1x128x128xbf16>
    %9 = vector.shape_cast %8 : vector<1x128x128xbf16> to vector<128x128xbf16>
    %cst = arith.constant dense<0.000000e+00> : vector<128x128xf32>
    %10 = tpu.matmul %7, %9, %cst {dimension_numbers = #tpu.dot_dimension_numbers<[1], [0], [0], [1], [0, 0, 1, 1], [], []>} : vector<128x128xbf16>, vector<128x128xbf16>, vector<128x128xf32> -> vector<128x128xf32>
    %cst_5 = arith.constant dense<0xFF800000> : vector<128xf32>
    %11 = vector.multi_reduction <maximumf>, %10, %cst_5 [0] : vector<128x128xf32> to vector<128xf32>
    %12 = vector.shape_cast %11 : vector<128xf32> to vector<1x128xf32>
    %c0_6 = arith.constant 0 : index
    %c0_7 = arith.constant 0 : index
    %c0_8 = arith.constant 0 : index
    %13 = vector.load %arg5[%c0_6, %c0_7, %c0_8] : memref<1x128x1xf32, #tpu.memory_space<vmem>>, vector<1x128x1xf32>
    %14 = vector.shape_cast %13 : vector<1x128x1xf32> to vector<128x1xf32>
    %15 = vector.broadcast %12 : vector<1x128xf32> to vector<128x128xf32>
    %16 = arith.cmpf oge, %10, %15 : vector<128x128xf32>
    %cst_9 = arith.constant 1.280000e+02 : f32
    %17 = vector.shape_cast %14 : vector<128x1xf32> to vector<128x1xf32>
    %18 = vector.broadcast %17 : vector<128x1xf32> to vector<128x128xf32>
    %19 = vector.broadcast %cst_9 : f32 to vector<128x128xf32>
    %20 = arith.select %16, %18, %19 : vector<128x128xi1>, vector<128x128xf32>
    %cst_10 = arith.constant dense<0x7F800000> : vector<128xf32>
    %21 = vector.multi_reduction <minimumf>, %20, %cst_10 [0] : vector<128x128xf32> to vector<128xf32>
    %22 = vector.shape_cast %21 : vector<128xf32> to vector<1x128xf32>
    %23 = arith.fptosi %22 : vector<1x128xf32> to vector<1x128xi32>
    %c0_11 = arith.constant 0 : index
    %c0_12 = arith.constant 0 : index
    %c0_13 = arith.constant 0 : index
    %24 = vector.load %arg6[%c0_11, %c0_12, %c0_13] : memref<1x1x128xf32, #tpu.memory_space<vmem>>, vector<1x1x128xf32>
    %25 = vector.shape_cast %24 : vector<1x1x128xf32> to vector<1x128xf32>
    %26 = arith.cmpf ogt, %12, %25 : vector<1x128xf32>
    %27 = arith.select %26, %12, %25 : vector<1x128xi1>, vector<1x128xf32>
    %c0_14 = arith.constant 0 : index
    %c0_15 = arith.constant 0 : index
    %c0_16 = arith.constant 0 : index
    %28 = vector.load %arg6[%c0_14, %c0_15, %c0_16] : memref<1x1x128xf32, #tpu.memory_space<vmem>>, vector<1x1x128xf32>
    %29 = vector.shape_cast %28 : vector<1x1x128xf32> to vector<1x128xf32>
    %30 = vector.shape_cast %27 : vector<1x128xf32> to vector<1x1x128xf32>
    tpu.vector_store %arg6[%c0_14, %c0_15, %c0_16], %30 {strides = array<i32>} : memref<1x1x128xf32, #tpu.memory_space<vmem>>, vector<1x1x128xf32>,
    %c0_17 = arith.constant 0 : index
    %c0_18 = arith.constant 0 : index
    %c0_19 = arith.constant 0 : index
    %31 = vector.load %arg7[%c0_17, %c0_18, %c0_19] : memref<1x1x128xi32, #tpu.memory_space<vmem>>, vector<1x1x128xi32>
    %32 = vector.shape_cast %31 : vector<1x1x128xi32> to vector<1x128xi32>
    %33 = arith.select %26, %23, %32 : vector<1x128xi1>, vector<1x128xi32>
    %c0_20 = arith.constant 0 : index
    %c0_21 = arith.constant 0 : index
    %c0_22 = arith.constant 0 : index
    %34 = vector.load %arg7[%c0_20, %c0_21, %c0_22] : memref<1x1x128xi32, #tpu.memory_space<vmem>>, vector<1x1x128xi32>
    %35 = vector.shape_cast %34 : vector<1x1x128xi32> to vector<1x128xi32>
    %36 = vector.shape_cast %33 : vector<1x128xi32> to vector<1x1x128xi32>
    tpu.vector_store %arg7[%c0_20, %c0_21, %c0_22], %36 {strides = array<i32>} : memref<1x1x128xi32, #tpu.memory_space<vmem>>, vector<1x1x128xi32>,
    return
  }
  func.func @transform_0(%arg0: i32, %arg1: i32, %arg2: i32) -> (i32, i32, i32) {
    %c0_i32 = arith.constant 0 : i32
    %c0_i32_0 = arith.constant 0 : i32
    return %arg0, %c0_i32, %arg1 : i32, i32, i32
  }
  func.func @transform_1(%arg0: i32, %arg1: i32, %arg2: i32) -> (i32, i32, i32) {
    %c0_i32 = arith.constant 0 : i32
    %c0_i32_0 = arith.constant 0 : i32
    %c0_i32_1 = arith.constant 0 : i32
    return %arg0, %c0_i32, %c0_i32_0 : i32, i32, i32
  }
  func.func @transform_2(%arg0: i32, %arg1: i32, %arg2: i32) -> (i32, i32, i32) {
    %c0_i32 = arith.constant 0 : i32
    %c0_i32_0 = arith.constant 0 : i32
    %c0_i32_1 = arith.constant 0 : i32
    return %c0_i32, %arg2, %c0_i32_0 : i32, i32, i32
  }
  func.func @transform_3(%arg0: i32, %arg1: i32, %arg2: i32) -> (i32, i32, i32) {
    %c0_i32 = arith.constant 0 : i32
    %c0_i32_0 = arith.constant 0 : i32
    return %arg0, %c0_i32, %arg1 : i32, i32, i32
  }
  func.func @transform_4(%arg0: i32, %arg1: i32, %arg2: i32) -> (i32, i32, i32) {
    %c0_i32 = arith.constant 0 : i32
    %c0_i32_0 = arith.constant 0 : i32
    return %arg0, %c0_i32, %arg1 : i32, i32, i32
  }
}

</mosaic_0001>

<llo_original>
// kernel: texture_transfer.1
$region0: #{texture_transfer.1}
  #allocation0 [shape = 'u32[]', space=smem, size = 0x4, offset = 0x4, fixed_abs, tag = 'smem constant byte address 0x4 - core index']
  #allocation1 [shape = 'u32[144,128]{1,0:T(1,128)}', space=vmem, size = 0x12000, scoped, tag = 'internal scratch']
  %s0 = inlined_call_operand.vmem [shape: bf16[2,128,128], index: 0, kind: input, shape index: {}]
  %s1 = inlined_call_operand.vmem [shape: bf16[2,128,128], index: 1, kind: input, shape index: {}]
  %s2 = inlined_call_operand.vmem [shape: f32[1,128,1], index: 2, kind: input, shape index: {}]
  %s3 = inlined_call_operand.vmem [shape: f32[2,1,128], index: 3, kind: output, shape index: {0}]
  %s4 = inlined_call_operand.vmem [shape: s32[2,1,128], index: 4, kind: output, shape index: {1}]
  %5 = xla_tuple %s3, %s4
  %s6 = sld [smem:[#allocation0]]
  $region57: #{texture_transfer.1} parent=0
    _
  %s8 = ssub.s32 1, %s6
  %s9 = scalar_select 0, %s8, %s6
  loop: start=0, step=1, limit=4
  $region2: #{texture_transfer.1} parent=0 // loop_pre_header
    _
  $region3: #{texture_transfer.1} parent=0 // loop_header
    %s11 = sphi 0, %s15
    %p12 = scmp.ge.s32.totalorder %s11, 4
    %s18 = sphi 0, %s37
    %s19 = sphi 0, %s33
    %s20 = sphi 0, %s29
    %s21 = sphi 0, %s18
    %s22 = sphi 0, %s19
    %s23 = sphi 0, %s20
    %s24 = sphi 0, %s21
    %s25 = sphi 0, %s22
    %s26 = sphi 0, %s23
    %s42 = sphi 0, %s44
    %s45 = sphi 0, %s42
    %s46 = sphi 0, %s45
    %s62 = sphi 0, %s46
    %s68 = sphi 0, %s70
    %s71 = sphi 0, %s68
    %s72 = sphi 0, %s71
    %s88 = sphi 0, %s72
    %s94 = sphi 0, %s96
    %s97 = sphi 0, %s94
    %s98 = sphi 0, %s97
    %s114 = sphi 0, %s98
    %s122 = sphi 0, %s124
    %s125 = sphi 0, %s122
    %s126 = sphi 0, %s125
    %s142 = sphi 0, %s126
    %s150 = sphi 0, %s152
    %s153 = sphi 0, %s150
    %s154 = sphi 0, %s153
    %s170 = sphi 0, %s154
  $region4: #{texture_transfer.1} parent=0 // loop_header_branch
    %14 = sbr.rel (%p12) target = $region8
  $region5: #{texture_transfer.1} parent=0 // loop_body
    %s16 = ssub.s32 %s11, 1
    %s17 = ssub.s32 %s11, 2
    %s27 = sadd.s32 1, %s20
    %p28 = scmp.ge.s32.totalorder %s27, 1
    %s29 = scalar_select %p28, 0, %s27
    %s30 = sadd.s32 1, %s19
    %s31 = scalar_select %p28, %s30, %s19
    %p32 = scmp.ge.s32.totalorder %s31, 1
    %s33 = scalar_select %p32, 0, %s31
    %s34 = sadd.s32 1, %s18
    %s35 = scalar_select %p32, %s34, %s18
    %p36 = scmp.ge.s32.totalorder %s35, 2
    %s37 = scalar_select %p36, 0, %s35
    %s38 = ssub.s32 %s18, %s37
    %s39 = ssub.s32 %s19, %s33
    %s40 = sor.u32 %s38, %s39
    %p41 = scmp.eq.s32.totalorder %s40, 0
    %s43 = sadd.s32 %s42, 1
    %s44 = scalar_select %p41, %s42, %s43
    %p47 = pneg %p41
    %p48 = scmp.eq.s32.totalorder %s11, 1
    %p49 = por %p47, %p48
    %p50 = scmp.ne.s32.totalorder %s42, %s45
    %p51 = scmp.eq.s32.totalorder %s11, 0
    %p52 = por %p50, %p51
    %p53 = scmp.ne.s32.totalorder %s42, %s45
    %p54 = scmp.eq.s32.totalorder %s16, 1
    %p55 = por %p53, %p54
    %p56 = scmp.ne.s32.totalorder %s45, %s46
    %p57 = scmp.eq.s32.totalorder %s16, 0
    %p58 = por %p56, %p57
    %p59 = scmp.ne.s32.totalorder %s45, %s46
    %p60 = scmp.eq.s32.totalorder %s17, 1
    %p61 = por %p59, %p60
    %p63 = scmp.ne.s32.totalorder %s46, %s62
    %p64 = scmp.eq.s32.totalorder %s17, 0
    %p65 = por %p63, %p64
    %s66 = ssub.s32 %s18, %s37
    %p67 = scmp.eq.s32.totalorder %s66, 0
    %s69 = sadd.s32 %s68, 1
    %s70 = scalar_select %p67, %s68, %s69
    %p73 = pneg %p67
    %p74 = scmp.eq.s32.totalorder %s11, 1
    %p75 = por %p73, %p74
    %p76 = scmp.ne.s32.totalorder %s68, %s71
    %p77 = scmp.eq.s32.totalorder %s11, 0
    %p78 = por %p76, %p77
    %p79 = scmp.ne.s32.totalorder %s68, %s71
    %p80 = scmp.eq.s32.totalorder %s16, 1
    %p81 = por %p79, %p80
    %p82 = scmp.ne.s32.totalorder %s71, %s72
    %p83 = scmp.eq.s32.totalorder %s16, 0
    %p84 = por %p82, %p83
    %p85 = scmp.ne.s32.totalorder %s71, %s72
    %p86 = scmp.eq.s32.totalorder %s17, 1
    %p87 = por %p85, %p86
    %p89 = scmp.ne.s32.totalorder %s72, %s88
    %p90 = scmp.eq.s32.totalorder %s17, 0
    %p91 = por %p89, %p90
    %s92 = ssub.s32 %s20, %s29
    %p93 = scmp.eq.s32.totalorder %s92, 0
    %s95 = sadd.s32 %s94, 1
    %s96 = scalar_select %p93, %s94, %s95
    %p99 = pneg %p93
    %p100 = scmp.eq.s32.totalorder %s11, 1
    %p101 = por %p99, %p100
    %p102 = scmp.ne.s32.totalorder %s94, %s97
    %p103 = scmp.eq.s32.totalorder %s11, 0
    %p104 = por %p102, %p103
    %p105 = scmp.ne.s32.totalorder %s94, %s97
    %p106 = scmp.eq.s32.totalorder %s16, 1
    %p107 = por %p105, %p106
    %p108 = scmp.ne.s32.totalorder %s97, %s98
    %p109 = scmp.eq.s32.totalorder %s16, 0
    %p110 = por %p108, %p109
    %p111 = scmp.ne.s32.totalorder %s97, %s98
    %p112 = scmp.eq.s32.totalorder %s17, 1
    %p113 = por %p111, %p112
    %p115 = scmp.ne.s32.totalorder %s98, %s114
    %p116 = scmp.eq.s32.totalorder %s17, 0
    %p117 = por %p115, %p116
    %s118 = ssub.s32 %s18, %s37
    %s119 = ssub.s32 %s19, %s33
    %s120 = sor.u32 %s118, %s119
    %p121 = scmp.eq.s32.totalorder %s120, 0
    %s123 = sadd.s32 %s122, 1
    %s124 = scalar_select %p121, %s122, %s123
    %p127 = pneg %p121
    %p128 = scmp.eq.s32.totalorder %s11, 1
    %p129 = por %p127, %p128
    %p130 = scmp.ne.s32.totalorder %s122, %s125
    %p131 = scmp.eq.s32.totalorder %s11, 0
    %p132 = por %p130, %p131
    %p133 = scmp.ne.s32.totalorder %s122, %s125
    %p134 = scmp.eq.s32.totalorder %s16, 1
    %p135 = por %p133, %p134
    %p136 = scmp.ne.s32.totalorder %s125, %s126
    %p137 = scmp.eq.s32.totalorder %s16, 0
    %p138 = por %p136, %p137
    %p139 = scmp.ne.s32.totalorder %s125, %s126
    %p140 = scmp.eq.s32.totalorder %s17, 1
    %p141 = por %p139, %p140
    %p143 = scmp.ne.s32.totalorder %s126, %s142
    %p144 = scmp.eq.s32.totalorder %s17, 0
    %p145 = por %p143, %p144
    %s146 = ssub.s32 %s18, %s37
    %s147 = ssub.s32 %s19, %s33
    %s148 = sor.u32 %s146, %s147
    %p149 = scmp.eq.s32.totalorder %s148, 0
    %s151 = sadd.s32 %s150, 1
    %s152 = scalar_select %p149, %s150, %s151
    %p155 = pneg %p149
    %p156 = scmp.eq.s32.totalorder %s11, 1
    %p157 = por %p155, %p156
    %p158 = scmp.ne.s32.totalorder %s150, %s153
    %p159 = scmp.eq.s32.totalorder %s11, 0
    %p160 = por %p158, %p159
    %p161 = scmp.ne.s32.totalorder %s150, %s153
    %p162 = scmp.eq.s32.totalorder %s16, 1
    %p163 = por %p161, %p162
    %p164 = scmp.ne.s32.totalorder %s153, %s154
    %p165 = scmp.eq.s32.totalorder %s16, 0
    %p166 = por %p164, %p165
    %p167 = scmp.ne.s32.totalorder %s153, %s154
    %p168 = scmp.eq.s32.totalorder %s17, 1
    %p169 = por %p167, %p168
    %p171 = scmp.ne.s32.totalorder %s154, %s170
    %p172 = scmp.eq.s32.totalorder %s17, 0
    %p173 = por %p171, %p172
    %p174 = scmp.le.s32.totalorder 1, %s11
    %p175 = scmp.lt.s32.totalorder %s11, 3
    %p176 = pnand %p174, %p175
    %p177 = pneg %p176
    // Predicated region
    $region9: #{texture_transfer.1} parent=5 // pred_check
      _
    $region10: #{texture_transfer.1} parent=5 // pred_check_branch
      %179 = sbr.rel (%p176) target = $region12
    $region11: #{texture_transfer.1} parent=5 // pred_region
      %s180 = ssub.s32 %s11, 1
      // Predicated region
      $region13: #{texture_transfer.1} parent=11 // pred_check
        %p181 = pneg %p110
      $region14: #{texture_transfer.1} parent=11 // pred_check_branch
        %183 = sbr.rel (%p181) target = $region16
      $region15: #{texture_transfer.1} parent=11 // pred_region
        %s184 = smul.u32 16, %s23
        %p185 = scmp.lt.s32.totalorder %s184, 15
        %s186 = scalar_select %p185, %s184, 15
        %s187 = smul.addr %s186, 8
        %s188 = scalar_lea.vmem %s2, %s187
        %s189 = smul.u32 16, %s23
      $region16: #{texture_transfer.1} parent=11 // pred_fallthru
        _
    $region12: #{texture_transfer.1} parent=5 // pred_fallthru
      _
    %p190 = scmp.lt.s32.totalorder %s11, 2
    // Predicated region
    $region17: #{texture_transfer.1} parent=5 // pred_check
      %p191 = pneg %p190
    $region18: #{texture_transfer.1} parent=5 // pred_check_branch
      %193 = sbr.rel (%p191) target = $region20
    $region19: #{texture_transfer.1} parent=5 // pred_region
      // Predicated region
      $region21: #{texture_transfer.1} parent=19 // pred_check
        %p194 = pneg %p52
      $region22: #{texture_transfer.1} parent=19 // pred_check_branch
        %196 = sbr.rel (%p194) target = $region24
      $region23: #{texture_transfer.1} parent=19 // pred_region
        %p197 = scmp.lt.s32.totalorder %s18, 1
        %s198 = scalar_select %p197, %s18, 1
        %p199 = scmp.lt.s32.totalorder %s19, 0
        %s200 = scalar_select %p199, %s19, 0
        %s201 = smul.addr %s198, 16
        %s202 = sadd.s32 %s200, %s201
        %s203 = smul.addr %s202, 4
        %s204 = scalar_lea.vmem %s0, %s203
      $region24: #{texture_transfer.1} parent=19 // pred_fallthru
        _
      // Predicated region
      $region25: #{texture_transfer.1} parent=19 // pred_check
        %p205 = pneg %p78
      $region26: #{texture_transfer.1} parent=19 // pred_check_branch
        %207 = sbr.rel (%p205) target = $region28
      $region27: #{texture_transfer.1} parent=19 // pred_region
        %p208 = scmp.lt.s32.totalorder %s18, 1
        %s209 = scalar_select %p208, %s18, 1
        %s210 = smul.addr %s209, 16
        %s211 = smul.addr %s210, 4
        %s212 = scalar_lea.vmem %s1, %s211
      $region28: #{texture_transfer.1} parent=19 // pred_fallthru
        _
    $region20: #{texture_transfer.1} parent=5 // pred_fallthru
      _
    %p213 = scmp.le.s32.totalorder 1, %s11
    %p214 = scmp.lt.s32.totalorder %s11, 3
    %p215 = pnand %p213, %p214
    %p216 = pneg %p215
    // Predicated region
    $region29: #{texture_transfer.1} parent=5 // pred_check
      _
    $region30: #{texture_transfer.1} parent=5 // pred_check_branch
      %218 = sbr.rel (%p215) target = $region32
    $region31: #{texture_transfer.1} parent=5 // pred_region
      %s219 = ssub.s32 %s11, 1
      %p220 = scmp.lt.s32.totalorder %s21, 1
      %s221 = scalar_select %p220, %s21, 1
      %p222 = scmp.lt.s32.totalorder %s22, 0
      %s223 = scalar_select %p222, %s22, 0
      %s224 = smul.addr %s221, 16
      %s225 = sadd.s32 %s223, %s224
      %s226 = smul.addr %s225, 4
      %s227 = scalar_lea.vmem %s0, %s226
      %p228 = pneg %p58
      %p229 = pneg %p55
      %p230 = scmp.lt.s32.totalorder %s21, 1
      %s231 = scalar_select %p230, %s21, 1
      %s232 = smul.addr %s231, 16
      %s233 = smul.addr %s232, 4
      %s234 = scalar_lea.vmem %s1, %s233
      %p235 = pneg %p84
      %p236 = pneg %p81
      %s237 = smul.u32 16, %s23
      %p238 = scmp.lt.s32.totalorder %s237, 15
      %s239 = scalar_select %p238, %s237, 15
      %s240 = smul.addr %s239, 8
      %s241 = scalar_lea.vmem %s2, %s240
      %p242 = pneg %p110
      %p243 = pneg %p107
      %p244 = pneg %p138
      %p245 = pneg %p135
      %p246 = scmp.lt.s32.totalorder %s21, 1
      %s247 = scalar_select %p246, %s21, 1
      %p248 = scmp.lt.s32.totalorder %s22, 0
      %s249 = scalar_select %p248, %s22, 0
      %s250 = sadd.s32 %s249, %s247
      %s251 = scalar_lea.vmem %s3, %s250
      %p252 = pneg %p166
      %p253 = pneg %p163
      %p254 = scmp.lt.s32.totalorder %s21, 1
      %s255 = scalar_select %p254, %s21, 1
      %p256 = scmp.lt.s32.totalorder %s22, 0
      %s257 = scalar_select %p256, %s22, 0
      %s258 = sadd.s32 %s257, %s255
      %s259 = scalar_lea.vmem %s4, %s258
      %p260 = scmp.lt.s32.totalorder %s21, 1
      %s261 = scalar_select %p260, %s21, 1
      %p262 = scmp.lt.s32.totalorder %s22, 0
      %s263 = scalar_select %p262, %s22, 0
      %s264 = smul.addr %s261, 16
      %s265 = sadd.s32 %s263, %s264
      %s266 = smul.addr %s265, 4
      %s267 = scalar_lea.vmem %s0, %s266
      %p268 = scmp.lt.s32.totalorder %s21, 1
      %s269 = scalar_select %p268, %s21, 1
      %s270 = smul.addr %s269, 16
      %s271 = smul.addr %s270, 4
      %s272 = scalar_lea.vmem %s1, %s271
      %s273 = smul.u32 16, %s23
      %p274 = scmp.lt.s32.totalorder %s273, 15
      %s275 = scalar_select %p274, %s273, 15
      %s276 = smul.addr %s275, 8
      %s277 = scalar_lea.vmem %s2, %s276
      %s278 = smul.u32 16, %s23
      %p279 = scmp.lt.s32.totalorder %s21, 1
      %s280 = scalar_select %p279, %s21, 1
      %p281 = scmp.lt.s32.totalorder %s22, 0
      %s282 = scalar_select %p281, %s22, 0
      %s283 = sadd.s32 %s282, %s280
      %s284 = scalar_lea.vmem %s3, %s283
      %p285 = scmp.lt.s32.totalorder %s21, 1
      %s286 = scalar_select %p285, %s21, 1
      %p287 = scmp.lt.s32.totalorder %s22, 0
      %s288 = scalar_select %p287, %s22, 0
      %s289 = sadd.s32 %s288, %s286
      %s290 = scalar_lea.vmem %s4, %s289
      %p292 = scmp.eq.s32.totalorder %s23, 0
      // Predicated region
      $region33: #{texture_transfer.1} parent=31 // pred_check
        %p293 = pneg %p292
      $region34: #{texture_transfer.1} parent=31 // pred_check_branch
        %295 = sbr.rel (%p293) target = $region36
      $region35: #{texture_transfer.1} parent=31 // pred_region
        %296 = vst [vmem:[%s284] sm:$0x1] -inf
        %297 = vst [vmem:[%s290] sm:$0x1] 0
      $region36: #{texture_transfer.1} parent=31 // pred_fallthru
        _
      %s298 = smul.u32 %s23, 128
      %s299 = sshra.s32 %s298, 3
      %s300 = sand.u32 %s298, 7
      %s301 = smul.addr %s299, 4
      %s302 = scalar_lea.vmem %s272, %s301
      %v303 = vld [vmem:[%s302] sm:$0xf]
      %v304 = vld [vmem:[%s302 + $0x4] sm:$0xf]
      %v305 = vld [vmem:[%s302 + $0x8] sm:$0xf]
      %v306 = vld [vmem:[%s302 + $0xc] sm:$0xf]
      %v307 = vld [vmem:[%s302 + $0x10] sm:$0xf]
      %v308 = vld [vmem:[%s302 + $0x14] sm:$0xf]
      %v309 = vld [vmem:[%s302 + $0x18] sm:$0xf]
      %v310 = vld [vmem:[%s302 + $0x1c] sm:$0xf]
      %v311 = vld [vmem:[%s302 + $0x20] sm:$0xf]
      %v312 = vld [vmem:[%s302 + $0x24] sm:$0xf]
      %v313 = vld [vmem:[%s302 + $0x28] sm:$0xf]
      %v314 = vld [vmem:[%s302 + $0x2c] sm:$0xf]
      %v315 = vld [vmem:[%s302 + $0x30] sm:$0xf]
      %v316 = vld [vmem:[%s302 + $0x34] sm:$0xf]
      %v317 = vld [vmem:[%s302 + $0x38] sm:$0xf]
      %v318 = vld [vmem:[%s302 + $0x3c] sm:$0xf]
      %v319 = vld [vmem:[%s267] sm:$0xf]
      %v320 = vld [vmem:[%s267 + $0x4] sm:$0xf]
      %v321 = vld [vmem:[%s267 + $0x8] sm:$0xf]
      %v322 = vld [vmem:[%s267 + $0xc] sm:$0xf]
      %v323 = vld [vmem:[%s267 + $0x10] sm:$0xf]
      %v324 = vld [vmem:[%s267 + $0x14] sm:$0xf]
      %v325 = vld [vmem:[%s267 + $0x18] sm:$0xf]
      %v326 = vld [vmem:[%s267 + $0x1c] sm:$0xf]
      %v327 = vld [vmem:[%s267 + $0x20] sm:$0xf]
      %v328 = vld [vmem:[%s267 + $0x24] sm:$0xf]
      %v329 = vld [vmem:[%s267 + $0x28] sm:$0xf]
      %v330 = vld [vmem:[%s267 + $0x2c] sm:$0xf]
      %v331 = vld [vmem:[%s267 + $0x30] sm:$0xf]
      %v332 = vld [vmem:[%s267 + $0x34] sm:$0xf]
      %v333 = vld [vmem:[%s267 + $0x38] sm:$0xf]
      %v334 = vld [vmem:[%s267 + $0x3c] sm:$0xf]
      %v351 = vunpack.c.l.b16 %v303
      %v352 = vunpack.c.l.b16 %v304
      %v353 = vunpack.c.l.b16 %v305
      %v354 = vunpack.c.l.b16 %v306
      %v355 = vunpack.c.l.b16 %v307
      %v356 = vunpack.c.l.b16 %v308
      %v357 = vunpack.c.l.b16 %v309
      %v358 = vunpack.c.l.b16 %v310
      %v359 = vunpack.c.l.b16 %v311
      %v360 = vunpack.c.l.b16 %v312
      %v361 = vunpack.c.l.b16 %v313
      %v362 = vunpack.c.l.b16 %v314
      %v363 = vunpack.c.l.b16 %v315
      %v364 = vunpack.c.l.b16 %v316
      %v365 = vunpack.c.l.b16 %v317
      %v366 = vunpack.c.l.b16 %v318
      %v367 = vpack.c.b16 %v352, %v351
      %v368 = vpack.c.b16 %v354, %v353
      %v369 = vpack.c.b16 %v356, %v355
      %v370 = vpack.c.b16 %v358, %v357
      %v371 = vpack.c.b16 %v360, %v359
      %v372 = vpack.c.b16 %v362, %v361
      %v373 = vpack.c.b16 %v364, %v363
      %v374 = vpack.c.b16 %v366, %v365
      %v399 = vunpack.c.l.b16 %v319
      %v400 = vunpack.c.l.b16 %v320
      %v401 = vunpack.c.l.b16 %v321
      %v402 = vunpack.c.l.b16 %v322
      %v403 = vunpack.c.l.b16 %v323
      %v404 = vunpack.c.l.b16 %v324
      %v405 = vunpack.c.l.b16 %v325
      %v406 = vunpack.c.l.b16 %v326
      %v407 = vunpack.c.l.b16 %v327
      %v408 = vunpack.c.l.b16 %v328
      %v409 = vunpack.c.l.b16 %v329
      %v410 = vunpack.c.l.b16 %v330
      %v411 = vunpack.c.l.b16 %v331
      %v412 = vunpack.c.l.b16 %v332
      %v413 = vunpack.c.l.b16 %v333
      %v414 = vunpack.c.l.b16 %v334
      %v415 = vpack.c.b16 %v400, %v399
      %v416 = vpack.c.b16 %v402, %v401
      %v417 = vpack.c.b16 %v404, %v403
      %v418 = vpack.c.b16 %v406, %v405
      %v419 = vpack.c.b16 %v408, %v407
      %v420 = vpack.c.b16 %v410, %v409
      %v421 = vpack.c.b16 %v412, %v411
      %v422 = vpack.c.b16 %v414, %v413
      %431 = vmatprep.subr.bf16.mxu0 0
      %432 = vmatpush1.bf16.msra.mxu0 %v415
      %433 = vmatprep.subr.bf16.mxu0 0
      %434 = vmatpush1.bf16.msra.mxu0 %v416
      %435 = vmatprep.subr.bf16.mxu0 0
      %436 = vmatpush1.bf16.msra.mxu0 %v417
      %437 = vmatprep.subr.bf16.mxu0 0
      %438 = vmatpush1.bf16.msra.mxu0 %v418
      %439 = vmatprep.subr.bf16.mxu0 0
      %440 = vmatpush1.bf16.msra.mxu0 %v419
      %441 = vmatprep.subr.bf16.mxu0 0
      %442 = vmatpush1.bf16.msra.mxu0 %v420
      %443 = vmatprep.subr.bf16.mxu0 0
      %444 = vmatpush1.bf16.msra.mxu0 %v421
      %445 = vmatprep.subr.bf16.mxu0 0
      %446 = vmatpush1.bf16.msra.mxu0 %v422
      %447 = vmatprep.subr.bf16.mxu0 0
      %448 = vmatpush1.bf16.msra.mxu0 0
      %449 = vmatprep.subr.bf16.mxu0 0
      %450 = vmatpush1.bf16.msra.mxu0 0
      %451 = vmatprep.subr.bf16.mxu0 0
      %452 = vmatpush1.bf16.msra.mxu0 0
      %453 = vmatprep.subr.bf16.mxu0 0
      %454 = vmatpush1.bf16.msra.mxu0 0
      %455 = vmatprep.subr.bf16.mxu0 0
      %456 = vmatpush1.bf16.msra.mxu0 0
      %457 = vmatprep.subr.bf16.mxu0 0
      %458 = vmatpush1.bf16.msra.mxu0 0
      %459 = vmatprep.subr.bf16.mxu0 0
      %460 = vmatpush1.bf16.msra.mxu0 0
      %461 = vmatprep.subr.bf16.mxu0 0
      %462 = vmatpush1.bf16.msra.mxu0 0
      %463 = vmatprep.mubr.bf16.mxu0 0
      %464 = vmatmul.mubr.bf16.gmra.mrb[0].mxu0 %v367
      %v465 = vpop.f32.mrb[0].mxu0
      %v466 = vadd.f32 0.0, %v465
      %v467 = vpop.f32.mrb[0].mxu0
      %v468 = vpop.f32.mrb[0].mxu0
      %v469 = vadd.f32 0.0, %v468
      %v470 = vpop.f32.mrb[0].mxu0
      %471 = vmatprep.mubr.bf16.mxu0 0
      %472 = vmatmul.mubr.bf16.gmra.mrb[0].mxu0 %v368
      %v473 = vpop.f32.mrb[0].mxu0
      %v474 = vadd.f32 0.0, %v473
      %v475 = vpop.f32.mrb[0].mxu0
      %v476 = vpop.f32.mrb[0].mxu0
      %v477 = vadd.f32 0.0, %v476
      %v478 = vpop.f32.mrb[0].mxu0
      %479 = vmatprep.mubr.bf16.mxu0 0
      %480 = vmatmul.mubr.bf16.gmra.mrb[0].mxu0 %v369
      %v481 = vpop.f32.mrb[0].mxu0
      %v482 = vadd.f32 0.0, %v481
      %v483 = vpop.f32.mrb[0].mxu0
      %v484 = vpop.f32.mrb[0].mxu0
      %v485 = vadd.f32 0.0, %v484
      %v486 = vpop.f32.mrb[0].mxu0
      %487 = vmatprep.mubr.bf16.mxu0 0
      %488 = vmatmul.mubr.bf16.gmra.mrb[0].mxu0 %v370
      %v489 = vpop.f32.mrb[0].mxu0
      %v490 = vadd.f32 0.0, %v489
      %v491 = vpop.f32.mrb[0].mxu0
      %v492 = vpop.f32.mrb[0].mxu0
      %v493 = vadd.f32 0.0, %v492
      %v494 = vpop.f32.mrb[0].mxu0
      %495 = vmatprep.mubr.bf16.mxu0 0
      %496 = vmatmul.mubr.bf16.gmra.mrb[0].mxu0 %v371
      %v497 = vpop.f32.mrb[0].mxu0
      %v498 = vadd.f32 0.0, %v497
      %v499 = vpop.f32.mrb[0].mxu0
      %v500 = vpop.f32.mrb[0].mxu0
      %v501 = vadd.f32 0.0, %v500
      %v502 = vpop.f32.mrb[0].mxu0
      %503 = vmatprep.mubr.bf16.mxu0 0
      %504 = vmatmul.mubr.bf16.gmra.mrb[0].mxu0 %v372
      %v505 = vpop.f32.mrb[0].mxu0
      %v506 = vadd.f32 0.0, %v505
      %v507 = vpop.f32.mrb[0].mxu0
      %v508 = vpop.f32.mrb[0].mxu0
      %v509 = vadd.f32 0.0, %v508
      %v510 = vpop.f32.mrb[0].mxu0
      %511 = vmatprep.mubr.bf16.mxu0 0
      %512 = vmatmul.mubr.bf16.gmra.mrb[0].mxu0 %v373
      %v513 = vpop.f32.mrb[0].mxu0
      %v514 = vadd.f32 0.0, %v513
      %v515 = vpop.f32.mrb[0].mxu0
      %v516 = vpop.f32.mrb[0].mxu0
      %v517 = vadd.f32 0.0, %v516
      %v518 = vpop.f32.mrb[0].mxu0
      %519 = vmatprep.mubr.bf16.mxu0 0
      %520 = vmatmul.mubr.bf16.gmra.mrb[0].mxu0 %v374
      %v521 = vpop.f32.mrb[0].mxu0
      %v522 = vadd.f32 0.0, %v521
      %v523 = vpop.f32.mrb[0].mxu0
      %v524 = vpop.f32.mrb[0].mxu0
      %v525 = vadd.f32 0.0, %v524
      %v526 = vpop.f32.mrb[0].mxu0
      %527 = vdwg.mxu0
      %v528 = vmax.f32 %v466, %v482
      %v529 = vmax.f32 %v469, %v485
      %v530 = vmax.f32 %v474, %v490
      %v531 = vmax.f32 %v477, %v493
      %v532 = vmax.f32 %v528, %v498
      %v533 = vmax.f32 %v529, %v501
      %v534 = vmax.f32 %v530, %v506
      %v535 = vmax.f32 %v531, %v509
      %v536 = vmax.f32 %v532, %v514
      %v537 = vmax.f32 %v533, %v517
      %v538 = vmax.f32 %v534, %v522
      %v539 = vmax.f32 %v535, %v525
      %v540 = vmax.f32 %v536, %v537
      %v541 = vmax.f32 %v538, %v539
      %v542 = vmax.f32 %v540, %v541
      %v543 = vrot.slane %v542, 4
      %v544 = vmax.f32 %v542, %v543
      %v545 = vrot.slane %v544, 2
      %v546 = vmax.f32 %v544, %v545
      %v547 = vrot.slane %v546, 1
      %v548 = vmax.f32 %v546, %v547
      %v549 = vld [vmem:[%s277] sm:$0xff]
      %v550 = vld [vmem:[%s277 + $0x8] sm:$0xff]
      %v551 = vld [vmem:[%s277 + $0x10] sm:$0xff]
      %v552 = vld [vmem:[%s277 + $0x18] sm:$0xff]
      %v553 = vld [vmem:[%s277 + $0x20] sm:$0xff]
      %v554 = vld [vmem:[%s277 + $0x28] sm:$0xff]
      %v555 = vld [vmem:[%s277 + $0x30] sm:$0xff]
      %v556 = vld [vmem:[%s277 + $0x38] sm:$0xff]
      %v557 = vld [vmem:[%s277 + $0x40] sm:$0xff]
      %v558 = vld [vmem:[%s277 + $0x48] sm:$0xff]
      %v559 = vld [vmem:[%s277 + $0x50] sm:$0xff]
      %v560 = vld [vmem:[%s277 + $0x58] sm:$0xff]
      %v561 = vld [vmem:[%s277 + $0x60] sm:$0xff]
      %v562 = vld [vmem:[%s277 + $0x68] sm:$0xff]
      %v563 = vld [vmem:[%s277 + $0x70] sm:$0xff]
      %v564 = vld [vmem:[%s277 + $0x78] sm:$0xff]
      %vm565 = vcmp.ge.f32.partialorder %v466, %v548
      %vm566 = vcmp.ge.f32.partialorder %v469, %v548
      %vm567 = vcmp.ge.f32.partialorder %v474, %v548
      %vm568 = vcmp.ge.f32.partialorder %v477, %v548
      %vm569 = vcmp.ge.f32.partialorder %v482, %v548
      %vm570 = vcmp.ge.f32.partialorder %v485, %v548
      %vm571 = vcmp.ge.f32.partialorder %v490, %v548
      %vm572 = vcmp.ge.f32.partialorder %v493, %v548
      %vm573 = vcmp.ge.f32.partialorder %v498, %v548
      %vm574 = vcmp.ge.f32.partialorder %v501, %v548
      %vm575 = vcmp.ge.f32.partialorder %v506, %v548
      %vm576 = vcmp.ge.f32.partialorder %v509, %v548
      %vm577 = vcmp.ge.f32.partialorder %v514, %v548
      %vm578 = vcmp.ge.f32.partialorder %v517, %v548
      %vm579 = vcmp.ge.f32.partialorder %v522, %v548
      %vm580 = vcmp.ge.f32.partialorder %v525, %v548
      %582 = vset.pattern.permute.xlu0 0
      %583 = vperm.xlu0 %582, %v549
      %v584 = vpop.permute.xlu0 %583
      %587 = vset.pattern.permute.xlu0 0
      %588 = vperm.xlu0 %587, %v550
      %v589 = vpop.permute.xlu0 %588
      %592 = vset.pattern.permute.xlu0 0
      %593 = vperm.xlu0 %592, %v551
      %v594 = vpop.permute.xlu0 %593
      %597 = vset.pattern.permute.xlu0 0
      %598 = vperm.xlu0 %597, %v552
      %v599 = vpop.permute.xlu0 %598
      %602 = vset.pattern.permute.xlu0 0
      %603 = vperm.xlu0 %602, %v553
      %v604 = vpop.permute.xlu0 %603
      %607 = vset.pattern.permute.xlu0 0
      %608 = vperm.xlu0 %607, %v554
      %v609 = vpop.permute.xlu0 %608
      %612 = vset.pattern.permute.xlu0 0
      %613 = vperm.xlu0 %612, %v555
      %v614 = vpop.permute.xlu0 %613
      %617 = vset.pattern.permute.xlu0 0
      %618 = vperm.xlu0 %617, %v556
      %v619 = vpop.permute.xlu0 %618
      %622 = vset.pattern.permute.xlu0 0
      %623 = vperm.xlu0 %622, %v557
      %v624 = vpop.permute.xlu0 %623
      %627 = vset.pattern.permute.xlu0 0
      %628 = vperm.xlu0 %627, %v558
      %v629 = vpop.permute.xlu0 %628
      %632 = vset.pattern.permute.xlu0 0
      %633 = vperm.xlu0 %632, %v559
      %v634 = vpop.permute.xlu0 %633
      %637 = vset.pattern.permute.xlu0 0
      %638 = vperm.xlu0 %637, %v560
      %v639 = vpop.permute.xlu0 %638
      %642 = vset.pattern.permute.xlu0 0
      %643 = vperm.xlu0 %642, %v561
      %v644 = vpop.permute.xlu0 %643
      %647 = vset.pattern.permute.xlu0 0
      %648 = vperm.xlu0 %647, %v562
      %v649 = vpop.permute.xlu0 %648
      %652 = vset.pattern.permute.xlu0 0
      %653 = vperm.xlu0 %652, %v563
      %v654 = vpop.permute.xlu0 %653
      %657 = vset.pattern.permute.xlu0 0
      %658 = vperm.xlu0 %657, %v564
      %v659 = vpop.permute.xlu0 %658
      %v661 = vsel %vm565, %v584, 128.0
      %v662 = vsel %vm566, %v589, 128.0
      %v663 = vsel %vm567, %v594, 128.0
      %v664 = vsel %vm568, %v599, 128.0
      %v665 = vsel %vm569, %v604, 128.0
      %v666 = vsel %vm570, %v609, 128.0
      %v667 = vsel %vm571, %v614, 128.0
      %v668 = vsel %vm572, %v619, 128.0
      %v669 = vsel %vm573, %v624, 128.0
      %v670 = vsel %vm574, %v629, 128.0
      %v671 = vsel %vm575, %v634, 128.0
      %v672 = vsel %vm576, %v639, 128.0
      %v673 = vsel %vm577, %v644, 128.0
      %v674 = vsel %vm578, %v649, 128.0
      %v675 = vsel %vm579, %v654, 128.0
      %v676 = vsel %vm580, %v659, 128.0
      %v677 = vmin.f32 %v661, %v665
      %v678 = vmin.f32 %v662, %v666
      %v679 = vmin.f32 %v663, %v667
      %v680 = vmin.f32 %v664, %v668
      %v681 = vmin.f32 %v677, %v669
      %v682 = vmin.f32 %v678, %v670
      %v683 = vmin.f32 %v679, %v671
      %v684 = vmin.f32 %v680, %v672
      %v685 = vmin.f32 %v681, %v673
      %v686 = vmin.f32 %v682, %v674
      %v687 = vmin.f32 %v683, %v675
      %v688 = vmin.f32 %v684, %v676
      %v689 = vmin.f32 %v685, %v686
      %v690 = vmin.f32 %v687, %v688
      %v691 = vmin.f32 %v689, %v690
      %v692 = vrot.slane %v691, 4
      %v693 = vmin.f32 %v691, %v692
      %v694 = vrot.slane %v693, 2
      %v695 = vmin.f32 %v693, %v694
      %v696 = vrot.slane %v695, 1
      %v697 = vmin.f32 %v695, %v696
      %v698 = vcvt.f32.s32.to.zero.pseudo %v697
      %v699 = vld [vmem:[%s284] sm:$0x1]
      %vm700 = vcmp.gt.f32.partialorder %v548, %v699
      %v701 = vsel %vm700, %v548, %v699
      %702 = vst [vmem:[%s284] sm:$0x1] %v701
      %v703 = vld [vmem:[%s290] sm:$0x1]
      %v704 = vsel %vm700, %v698, %v703
      %705 = vst [vmem:[%s290] sm:$0x1] %v704
      %p706 = scmp.lt.s32.totalorder %s21, 1
      %s707 = scalar_select %p706, %s21, 1
      %p708 = scmp.lt.s32.totalorder %s22, 0
      %s709 = scalar_select %p708, %s22, 0
      %s710 = sadd.s32 %s709, %s707
      %s711 = scalar_lea.vmem %s3, %s710
      %p712 = scmp.lt.s32.totalorder %s21, 1
      %s713 = scalar_select %p712, %s21, 1
      %p714 = scmp.lt.s32.totalorder %s22, 0
      %s715 = scalar_select %p714, %s22, 0
      %s716 = sadd.s32 %s715, %s713
      %s717 = scalar_lea.vmem %s4, %s716
      // Predicated region
      $region37: #{texture_transfer.1} parent=31 // pred_check
        %p718 = pneg %p135
      $region38: #{texture_transfer.1} parent=31 // pred_check_branch
        %720 = sbr.rel (%p718) target = $region40
      $region39: #{texture_transfer.1} parent=31 // pred_region
        _
      $region40: #{texture_transfer.1} parent=31 // pred_fallthru
        _
      // Predicated region
      $region41: #{texture_transfer.1} parent=31 // pred_check
        %p721 = pneg %p163
      $region42: #{texture_transfer.1} parent=31 // pred_check_branch
        %723 = sbr.rel (%p721) target = $region44
      $region43: #{texture_transfer.1} parent=31 // pred_region
        _
      $region44: #{texture_transfer.1} parent=31 // pred_fallthru
        _
    $region32: #{texture_transfer.1} parent=5 // pred_fallthru
      _
    %p724 = scmp.le.s32.totalorder 2, %s11
    // Predicated region
    $region45: #{texture_transfer.1} parent=5 // pred_check
      %p725 = pneg %p724
    $region46: #{texture_transfer.1} parent=5 // pred_check_branch
      %727 = sbr.rel (%p725) target = $region48
    $region47: #{texture_transfer.1} parent=5 // pred_region
      %s728 = ssub.s32 %s11, 2
      // Predicated region
      $region49: #{texture_transfer.1} parent=47 // pred_check
        %p729 = pneg %p141
      $region50: #{texture_transfer.1} parent=47 // pred_check_branch
        %731 = sbr.rel (%p729) target = $region52
      $region51: #{texture_transfer.1} parent=47 // pred_region
        %p732 = scmp.lt.s32.totalorder %s24, 1
        %s733 = scalar_select %p732, %s24, 1
        %p734 = scmp.lt.s32.totalorder %s25, 0
        %s735 = scalar_select %p734, %s25, 0
        %s736 = sadd.s32 %s735, %s733
        %s737 = scalar_lea.vmem %s3, %s736
      $region52: #{texture_transfer.1} parent=47 // pred_fallthru
        _
      // Predicated region
      $region53: #{texture_transfer.1} parent=47 // pred_check
        %p738 = pneg %p169
      $region54: #{texture_transfer.1} parent=47 // pred_check_branch
        %740 = sbr.rel (%p738) target = $region56
      $region55: #{texture_transfer.1} parent=47 // pred_region
        %p741 = scmp.lt.s32.totalorder %s24, 1
        %s742 = scalar_select %p741, %s24, 1
        %p743 = scmp.lt.s32.totalorder %s25, 0
        %s744 = scalar_select %p743, %s25, 0
        %s745 = sadd.s32 %s744, %s742
        %s746 = scalar_lea.vmem %s4, %s745
      $region56: #{texture_transfer.1} parent=47 // pred_fallthru
        _
    $region48: #{texture_transfer.1} parent=5 // pred_fallthru
      _
  $region6: #{texture_transfer.1} parent=0 // loop_footer
    %s15 = sadd.s32 1, %s11
  $region7: #{texture_transfer.1} parent=0 // loop_footer_branch
    %10 = sbr.rel target = $region3
  $region8: #{texture_transfer.1} parent=0 // loop_exit
    _

// kernel: squeeze.379
$region0: #{squeeze.379}
  %s0 = inlined_call_operand.vmem [shape: f32[2,64], index: 0, kind: input, shape index: {}]
  %s1 = inlined_call_operand.hbm [shape: f32[2,1,8,8], index: 1, kind: output, shape index: {}]
  $region1: #{squeeze.379} parent=0
    #allocation0 [shape = 'u8[8192]{0}', space=vmem, size = 0x2000, scoped, tag = 'operand span for operand 1']
    #allocation1 [shape = 's32[1]{0}', space=sflag, size = 0x4, scoped, tag = 'scoped memory for squeeze.379']
    #allocation2 [shape = 'u8[4096]{0}', space=vmem, size = 0x1000, scoped, tag = 'scoped mem for input reshape']
    %2 = vsyncpa [#allocation1], 0
    %s4 = sshllo.u32 0, 2
    %v5 = vld [vmem:[%s0] sm:%s4]
    %6 = vst [vmem:[#allocation2] sm:%s4] %v5
    %v7 = vld [vmem:[#allocation2] sm:$0x3]
    %vm8 = vcmask 64512
    %9 = vst.msk [vmem:[#allocation0] ss:$8 sm:$0x3] %vm8, %v7
    %v10 = vld [vmem:[#allocation2] sm:$0x3]
    %11 = vrot.lane.b32.xlu0 %v10, 120
    %v12 = vpop.permute.xlu0 %11
    %vm13 = vcmask 64512
    %s14 = scalar_lea.vmem [#allocation0], 1
    %15 = vst.msk [vmem:[%s14] ss:$8 sm:$0x3] %vm13, %v12
    %v16 = vld [vmem:[#allocation2] sm:$0x3]
    %17 = vrot.lane.b32.xlu0 %v16, 112
    %v18 = vpop.permute.xlu0 %17
    %vm19 = vcmask 64512
    %s20 = scalar_lea.vmem [#allocation0], 2
    %21 = vst.msk [vmem:[%s20] ss:$8 sm:$0x3] %vm19, %v18
    %v22 = vld [vmem:[#allocation2] sm:$0x3]
    %23 = vrot.lane.b32.xlu0 %v22, 104
    %v24 = vpop.permute.xlu0 %23
    %vm25 = vcmask 64512
    %s26 = scalar_lea.vmem [#allocation0], 3
    %27 = vst.msk [vmem:[%s26] ss:$8 sm:$0x3] %vm25, %v24
    %v28 = vld [vmem:[#allocation2] sm:$0x3]
    %29 = vrot.lane.b32.xlu0 %v28, 96
    %v30 = vpop.permute.xlu0 %29
    %vm31 = vcmask 64512
    %s32 = scalar_lea.vmem [#allocation0], 4
    %33 = vst.msk [vmem:[%s32] ss:$8 sm:$0x3] %vm31, %v30
    %v34 = vld [vmem:[#allocation2] sm:$0x3]
    %35 = vrot.lane.b32.xlu0 %v34, 88
    %v36 = vpop.permute.xlu0 %35
    %vm37 = vcmask 64512
    %s38 = scalar_lea.vmem [#allocation0], 5
    %39 = vst.msk [vmem:[%s38] ss:$8 sm:$0x3] %vm37, %v36
    %v40 = vld [vmem:[#allocation2] sm:$0x3]
    %41 = vrot.lane.b32.xlu0 %v40, 80
    %v42 = vpop.permute.xlu0 %41
    %vm43 = vcmask 64512
    %s44 = scalar_lea.vmem [#allocation0], 6
    %45 = vst.msk [vmem:[%s44] ss:$8 sm:$0x3] %vm43, %v42
    %v46 = vld [vmem:[#allocation2] sm:$0x3]
    %47 = vrot.lane.b32.xlu0 %v46, 72
    %v48 = vpop.permute.xlu0 %47
    %vm49 = vcmask 64512
    %s50 = scalar_lea.vmem [#allocation0], 7
    %51 = vst.msk [vmem:[%s50] ss:$8 sm:$0x3] %vm49, %v48
    %s53 = ssub.s32 256, 256
    %54 = vsyncadd [#allocation1], %s53
    %s56 = sshll.u32 [#allocation0], 4
    %s57 = int_to_ptr.vmem [resolvable:$true] %s56
    %59 = dma.vmem_to_hbm [thread:$0]  %s57, 256, %s1, [#allocation1]
    %60 = dma.done [#allocation1], 256
    %61 = vsyncpa [#allocation1], 1

</llo_original>
